<compile_context>
chip_gen: v7x
topology: tpu7x:2x2x1
jax: 0.10.0
libtpu: 0.0.40
codegen_flags: <defaults>
</compile_context>

<pallas_src>
import jax
import jax.numpy as jnp
from jax.experimental import pallas as pl
from jax.experimental.pallas import tpu as pltpu

MIN_LOG_STD = -10.0
MAX_LOG_STD = 2.0
_NEG_BIG = -3.0e38   # finite "no lower clip" sentinel for mu / pad lanes
_POS_BIG = 3.0e38    # finite "no upper clip" sentinel for mu / pad lanes


def _round_up(x, m):
    return ((x + m - 1) // m) * m


def actor_kernel(x_ref, w1_ref, b1_ref, w2_ref, b2_ref, wh_ref, bh_ref,
                 lo_ref, hi_ref, out_ref):
    # fc1 + ReLU (bf16 operands, f32 MXU accumulate)
    x = x_ref[...].astype(jnp.bfloat16)
    h1 = jnp.dot(x, w1_ref[...], preferred_element_type=jnp.float32) + b1_ref[...]
    h1 = jnp.maximum(h1, 0.0).astype(jnp.bfloat16)

    # fc2 + ReLU
    h2 = jnp.dot(h1, w2_ref[...], preferred_element_type=jnp.float32) + b2_ref[...]
    h2 = jnp.maximum(h2, 0.0).astype(jnp.bfloat16)

    # fused heads: lanes [0, A) = mu, lanes [A, 2A) = log_std, rest zero pad.
    head = jnp.dot(h2, wh_ref[...], preferred_element_type=jnp.float32) + bh_ref[...]

    # Per-lane clip: mu/pad lanes get (-BIG, +BIG) (no-op), log_std lanes get
    # (max(0, min_log_std), max_log_std) -- identical to relu-then-clamp.
    out_ref[...] = jnp.minimum(jnp.maximum(head, lo_ref[...]),
                               hi_ref[...]).astype(out_ref.dtype)


def prepare_params(params, min_log_std=MIN_LOG_STD, max_log_std=MAX_LOG_STD):
    """One-time parameter prep (call at init / after each param update)."""
    state_dim, h1_dim = params["w1"].shape
    h2_dim = params["w2"].shape[1]
    A = params["wmu"].shape[1]
    k_pad = _round_up(state_dim, 128)
    head_pad = _round_up(2 * A, 128)

    w1 = jnp.pad(params["w1"].astype(jnp.float32),
                 ((0, k_pad - state_dim), (0, 0))).astype(jnp.bfloat16)
    w2 = params["w2"].astype(jnp.bfloat16)
    wh = jnp.concatenate([params["wmu"], params["wls"]], axis=1)
    wh = jnp.pad(wh, ((0, 0), (0, head_pad - 2 * A))).astype(jnp.bfloat16)

    b1 = params["b1"].astype(jnp.float32).reshape(1, h1_dim)
    b2 = params["b2"].astype(jnp.float32).reshape(1, h2_dim)
    bh = jnp.concatenate([params["bmu"], params["bls"]], axis=1)
    bh = jnp.pad(bh, ((0, 0), (0, head_pad - 2 * A))).astype(jnp.float32)

    lane = jnp.arange(head_pad)
    is_ls = (lane >= A) & (lane < 2 * A)
    lo = jnp.where(is_ls, max(0.0, float(min_log_std)), _NEG_BIG)
    hi = jnp.where(is_ls, float(max_log_std), _POS_BIG)
    lo = lo.astype(jnp.float32)[None, :]
    hi = hi.astype(jnp.float32)[None, :]

    return {"w1": w1, "b1": b1, "w2": w2, "b2": b2,
            "wh": wh, "bh": bh, "lo": lo, "hi": hi}


def _choose_block_b(B):
    if B <= 128:
        return min(_round_up(max(B, 16), 16), 128)   # single small block
    if B <= 256:
        return 128   # >=2 grid steps -> both v7x TensorCores busy
    if B <= 1024:
        return 256   # matches 256-wide MXU rows on v6e/v7x, >=2 steps
    return 512       # large batches: amortize per-step overhead


def actor_forward(x, prep, action_dim):
    """x: (B, state_dim) float32. prep: output of prepare_params.
    Returns (mu, log_std), each (B, action_dim) float32."""
    B, state_dim = x.shape
    k_pad, h1_dim = prep["w1"].shape
    h2_dim, head_pad = prep["wh"].shape
    A = action_dim

    block_b = _choose_block_b(B)
    B_pad = _round_up(B, block_b)

    pad_b = B_pad - B
    pad_k = k_pad - state_dim
    if pad_b or pad_k:
        x = jnp.pad(x, ((0, pad_b), (0, pad_k)))

    grid = (B_pad // block_b,)

    flops = 2 * B_pad * (k_pad * h1_dim + h1_dim * h2_dim + h2_dim * head_pad)
    bytes_accessed = (
        B_pad * k_pad * 4                                  # x (f32)
        + prep["w1"].size * 2 + prep["w2"].size * 2 + prep["wh"].size * 2
        + (prep["b1"].size + prep["b2"].size + prep["bh"].size
           + prep["lo"].size + prep["hi"].size) * 4
        + B_pad * head_pad * 2                             # out (bf16)
    )

    out = pl.pallas_call(
        actor_kernel,
        out_shape=jax.ShapeDtypeStruct((B_pad, head_pad), jnp.bfloat16),
        grid=grid,
        in_specs=[
            pl.BlockSpec((block_b, k_pad), lambda i: (i, 0)),   # x tile
            pl.BlockSpec((k_pad, h1_dim), lambda i: (0, 0)),    # W1 (resident)
            pl.BlockSpec((1, h1_dim), lambda i: (0, 0)),        # b1
            pl.BlockSpec((h1_dim, h2_dim), lambda i: (0, 0)),   # W2 (resident)
            pl.BlockSpec((1, h2_dim), lambda i: (0, 0)),        # b2
            pl.BlockSpec((h2_dim, head_pad), lambda i: (0, 0)), # fused heads W
            pl.BlockSpec((1, head_pad), lambda i: (0, 0)),      # fused heads b
            pl.BlockSpec((1, head_pad), lambda i: (0, 0)),      # per-lane lo
            pl.BlockSpec((1, head_pad), lambda i: (0, 0)),      # per-lane hi
        ],
        out_specs=pl.BlockSpec((block_b, head_pad), lambda i: (i, 0)),
        compiler_params=pltpu.CompilerParams(
            dimension_semantics=("parallel",),
            vmem_limit_bytes=32 * 1024 * 1024),
        cost_estimate=pl.CostEstimate(flops=flops, transcendentals=0,
                                      bytes_accessed=bytes_accessed),
    )(x, prep["w1"], prep["b1"], prep["w2"], prep["b2"],
      prep["wh"], prep["bh"], prep["lo"], prep["hi"])

    mu = out[:B, :A].astype(jnp.float32)
    log_std = out[:B, A:2 * A].astype(jnp.float32)
    return mu, log_std


def init_params(key, state_dim, action_dim):
    """Deterministic PyTorch-Linear-style init: U(-1/sqrt(fan_in), 1/sqrt(fan_in))."""
    ks = jax.random.split(key, 8)

    def lin(kw, kb, fan_in, fan_out):
        bound = 1.0 / jnp.sqrt(fan_in)
        w = jax.random.uniform(kw, (fan_in, fan_out), jnp.float32, -bound, bound)
        b = jax.random.uniform(kb, (1, fan_out), jnp.float32, -bound, bound)
        return w, b

    w1, b1 = lin(ks[0], ks[1], state_dim, 256)
    w2, b2 = lin(ks[2], ks[3], 256, 512)
    wmu, bmu = lin(ks[4], ks[5], 512, action_dim)
    wls, bls = lin(ks[6], ks[7], 512, action_dim)
    return {"w1": w1, "b1": b1, "w2": w2, "b2": b2,
            "wmu": wmu, "bmu": bmu, "wls": wls, "bls": bls}


def actor_forward_ref(x, p):
    """Pure-JAX reference mirroring the kernel numerics (bf16 operands,
    f32 accumulate, bf16 output storage)."""
    hp = jax.lax.Precision.HIGHEST

    def q(a):  # bf16 round-trip (matches kernel operand / output rounding)
        return a.astype(jnp.bfloat16).astype(jnp.float32)

    h1 = jnp.maximum(jnp.dot(q(x), q(p["w1"]), precision=hp) + p["b1"], 0.0)
    h2 = jnp.maximum(jnp.dot(q(h1), q(p["w2"]), precision=hp) + p["b2"], 0.0)
    mu = jnp.dot(q(h2), q(p["wmu"]), precision=hp) + p["bmu"]
    ls = jnp.clip(
        jnp.maximum(jnp.dot(q(h2), q(p["wls"]), precision=hp) + p["bls"], 0.0),
        MIN_LOG_STD, MAX_LOG_STD)
    return q(mu), q(ls)


if __name__ == "__main__":
    key = jax.random.PRNGKey(0)
    k_param, k_x = jax.random.split(key)

    batch = 8
    state_dim = 32     # env.num_obs (synthetic)
    action_dim = 8     # env.num_acts (synthetic)

    params = init_params(k_param, state_dim, action_dim)
    prep = jax.tree_util.tree_map(jnp.asarray, prepare_params(params))  # one-time prep
    x = jax.random.normal(k_x, (batch, state_dim), jnp.float32)

    fwd = jax.jit(actor_forward, static_argnames=("action_dim",))
    mu, log_std = fwd(x, prep, action_dim=action_dim)
    jax.block_until_ready((mu, log_std))

    mu_ref, ls_ref = actor_forward_ref(x, params)
    assert mu.shape == (batch, action_dim)
    assert log_std.shape == (batch, action_dim)
    assert jnp.allclose(mu, mu_ref, atol=1e-2, rtol=1e-2)
    assert jnp.allclose(log_std, ls_ref, atol=1e-2, rtol=1e-2)

    print("KERNEL_OK")
</pallas_src>

<mosaic_0001>
module attributes {stable_mosaic.version = 11 : i64} {
  func.func @actor_kernel(%arg0: i32, %arg1: memref<16x128xf32, #tpu.memory_space<vmem>>, %arg2: memref<128x256xbf16, #tpu.memory_space<vmem>>, %arg3: memref<1x256xf32, #tpu.memory_space<vmem>>, %arg4: memref<256x512xbf16, #tpu.memory_space<vmem>>, %arg5: memref<1x512xf32, #tpu.memory_space<vmem>>, %arg6: memref<512x128xbf16, #tpu.memory_space<vmem>>, %arg7: memref<1x128xf32, #tpu.memory_space<vmem>>, %arg8: memref<1x128xf32, #tpu.memory_space<vmem>>, %arg9: memref<1x128xf32, #tpu.memory_space<vmem>>, %arg10: memref<16x128xbf16, #tpu.memory_space<vmem>>) attributes {dimension_semantics = [#tpu.dimension_semantics<parallel>], iteration_bounds = array<i64: 1>, scalar_prefetch = 0 : i64, scratch_operands = 0 : i64, tpu.core_type = #tpu.core_type<tc>, window_params = [{transform_indices = @transform_0, window_bounds = array<i64: 16, 128>}, {pipeline_mode = #tpu.pipeline_mode<synchronous>, transform_indices = @transform_1, window_bounds = array<i64: 128, 256>}, {pipeline_mode = #tpu.pipeline_mode<synchronous>, transform_indices = @transform_2, window_bounds = array<i64: 1, 256>}, {pipeline_mode = #tpu.pipeline_mode<synchronous>, transform_indices = @transform_3, window_bounds = array<i64: 256, 512>}, {pipeline_mode = #tpu.pipeline_mode<synchronous>, transform_indices = @transform_4, window_bounds = array<i64: 1, 512>}, {pipeline_mode = #tpu.pipeline_mode<synchronous>, transform_indices = @transform_5, window_bounds = array<i64: 512, 128>}, {pipeline_mode = #tpu.pipeline_mode<synchronous>, transform_indices = @transform_6, window_bounds = array<i64: 1, 128>}, {pipeline_mode = #tpu.pipeline_mode<synchronous>, transform_indices = @transform_7, window_bounds = array<i64: 1, 128>}, {pipeline_mode = #tpu.pipeline_mode<synchronous>, transform_indices = @transform_8, window_bounds = array<i64: 1, 128>}, {transform_indices = @transform_9, window_bounds = array<i64: 16, 128>}]} {
    %c0 = arith.constant 0 : index
    %c0_0 = arith.constant 0 : index
    %0 = vector.load %arg1[%c0, %c0_0] : memref<16x128xf32, #tpu.memory_space<vmem>>, vector<16x128xf32>
    %1 = arith.truncf %0 : vector<16x128xf32> to vector<16x128xbf16>
    %c0_1 = arith.constant 0 : index
    %c0_2 = arith.constant 0 : index
    %2 = vector.load %arg2[%c0_1, %c0_2] : memref<128x256xbf16, #tpu.memory_space<vmem>>, vector<128x256xbf16>
    %cst = arith.constant dense<0.000000e+00> : vector<16x256xf32>
    %3 = tpu.matmul %1, %2, %cst {dimension_numbers = #tpu.dot_dimension_numbers<[1], [0], [0], [1], [0, 0, 1, 1], [], []>} : vector<16x128xbf16>, vector<128x256xbf16>, vector<16x256xf32> -> vector<16x256xf32>
    %c0_3 = arith.constant 0 : index
    %c0_4 = arith.constant 0 : index
    %4 = vector.load %arg3[%c0_3, %c0_4] : memref<1x256xf32, #tpu.memory_space<vmem>>, vector<1x256xf32>
    %5 = vector.broadcast %4 : vector<1x256xf32> to vector<16x256xf32>
    %6 = arith.addf %3, %5 : vector<16x256xf32>
    %cst_5 = arith.constant 0.000000e+00 : f32
    %7 = vector.broadcast %cst_5 : f32 to vector<16x256xf32>
    %8 = arith.maximumf %6, %7 : vector<16x256xf32>
    %9 = arith.truncf %8 : vector<16x256xf32> to vector<16x256xbf16>
    %c0_6 = arith.constant 0 : index
    %c0_7 = arith.constant 0 : index
    %10 = vector.load %arg4[%c0_6, %c0_7] : memref<256x512xbf16, #tpu.memory_space<vmem>>, vector<256x512xbf16>
    %cst_8 = arith.constant dense<0.000000e+00> : vector<16x512xf32>
    %11 = tpu.matmul %9, %10, %cst_8 {dimension_numbers = #tpu.dot_dimension_numbers<[1], [0], [0], [1], [0, 0, 1, 1], [], []>} : vector<16x256xbf16>, vector<256x512xbf16>, vector<16x512xf32> -> vector<16x512xf32>
    %c0_9 = arith.constant 0 : index
    %c0_10 = arith.constant 0 : index
    %12 = vector.load %arg5[%c0_9, %c0_10] : memref<1x512xf32, #tpu.memory_space<vmem>>, vector<1x512xf32>
    %13 = vector.broadcast %12 : vector<1x512xf32> to vector<16x512xf32>
    %14 = arith.addf %11, %13 : vector<16x512xf32>
    %cst_11 = arith.constant 0.000000e+00 : f32
    %15 = vector.broadcast %cst_11 : f32 to vector<16x512xf32>
    %16 = arith.maximumf %14, %15 : vector<16x512xf32>
    %17 = arith.truncf %16 : vector<16x512xf32> to vector<16x512xbf16>
    %c0_12 = arith.constant 0 : index
    %c0_13 = arith.constant 0 : index
    %18 = vector.load %arg6[%c0_12, %c0_13] : memref<512x128xbf16, #tpu.memory_space<vmem>>, vector<512x128xbf16>
    %cst_14 = arith.constant dense<0.000000e+00> : vector<16x128xf32>
    %19 = tpu.matmul %17, %18, %cst_14 {dimension_numbers = #tpu.dot_dimension_numbers<[1], [0], [0], [1], [0, 0, 1, 1], [], []>} : vector<16x512xbf16>, vector<512x128xbf16>, vector<16x128xf32> -> vector<16x128xf32>
    %c0_15 = arith.constant 0 : index
    %c0_16 = arith.constant 0 : index
    %20 = vector.load %arg7[%c0_15, %c0_16] : memref<1x128xf32, #tpu.memory_space<vmem>>, vector<1x128xf32>
    %21 = vector.broadcast %20 : vector<1x128xf32> to vector<16x128xf32>
    %22 = arith.addf %19, %21 : vector<16x128xf32>
    %c0_17 = arith.constant 0 : index
    %c0_18 = arith.constant 0 : index
    %23 = vector.load %arg8[%c0_17, %c0_18] : memref<1x128xf32, #tpu.memory_space<vmem>>, vector<1x128xf32>
    %24 = vector.broadcast %23 : vector<1x128xf32> to vector<16x128xf32>
    %25 = arith.maximumf %22, %24 : vector<16x128xf32>
    %c0_19 = arith.constant 0 : index
    %c0_20 = arith.constant 0 : index
    %26 = vector.load %arg9[%c0_19, %c0_20] : memref<1x128xf32, #tpu.memory_space<vmem>>, vector<1x128xf32>
    %27 = vector.broadcast %26 : vector<1x128xf32> to vector<16x128xf32>
    %28 = arith.minimumf %25, %27 : vector<16x128xf32>
    %29 = arith.truncf %28 : vector<16x128xf32> to vector<16x128xbf16>
    %c0_21 = arith.constant 0 : index
    %c0_22 = arith.constant 0 : index
    %30 = vector.load %arg10[%c0_21, %c0_22] : memref<16x128xbf16, #tpu.memory_space<vmem>>, vector<16x128xbf16>
    tpu.vector_store %arg10[%c0_21, %c0_22], %29 {strides = array<i32>} : memref<16x128xbf16, #tpu.memory_space<vmem>>, vector<16x128xbf16>,
    return
  }
  func.func @transform_0(%arg0: i32) -> (i32, i32) {
    %c0_i32 = arith.constant 0 : i32
    %c0_i32_0 = arith.constant 0 : i32
    return %arg0, %c0_i32 : i32, i32
  }
  func.func @transform_1(%arg0: i32) -> (i32, i32) {
    %c0_i32 = arith.constant 0 : i32
    %c0_i32_0 = arith.constant 0 : i32
    %c0_i32_1 = arith.constant 0 : i32
    return %c0_i32, %c0_i32_0 : i32, i32
  }
  func.func @transform_2(%arg0: i32) -> (i32, i32) {
    %c0_i32 = arith.constant 0 : i32
    %c0_i32_0 = arith.constant 0 : i32
    %c0_i32_1 = arith.constant 0 : i32
    return %c0_i32, %c0_i32_0 : i32, i32
  }
  func.func @transform_3(%arg0: i32) -> (i32, i32) {
    %c0_i32 = arith.constant 0 : i32
    %c0_i32_0 = arith.constant 0 : i32
    %c0_i32_1 = arith.constant 0 : i32
    return %c0_i32, %c0_i32_0 : i32, i32
  }
  func.func @transform_4(%arg0: i32) -> (i32, i32) {
    %c0_i32 = arith.constant 0 : i32
    %c0_i32_0 = arith.constant 0 : i32
    %c0_i32_1 = arith.constant 0 : i32
    return %c0_i32, %c0_i32_0 : i32, i32
  }
  func.func @transform_5(%arg0: i32) -> (i32, i32) {
    %c0_i32 = arith.constant 0 : i32
    %c0_i32_0 = arith.constant 0 : i32
    %c0_i32_1 = arith.constant 0 : i32
    return %c0_i32, %c0_i32_0 : i32, i32
  }
  func.func @transform_6(%arg0: i32) -> (i32, i32) {
    %c0_i32 = arith.constant 0 : i32
    %c0_i32_0 = arith.constant 0 : i32
    %c0_i32_1 = arith.constant 0 : i32
    return %c0_i32, %c0_i32_0 : i32, i32
  }
  func.func @transform_7(%arg0: i32) -> (i32, i32) {
    %c0_i32 = arith.constant 0 : i32
    %c0_i32_0 = arith.constant 0 : i32
    %c0_i32_1 = arith.constant 0 : i32
    return %c0_i32, %c0_i32_0 : i32, i32
  }
  func.func @transform_8(%arg0: i32) -> (i32, i32) {
    %c0_i32 = arith.constant 0 : i32
    %c0_i32_0 = arith.constant 0 : i32
    %c0_i32_1 = arith.constant 0 : i32
    return %c0_i32, %c0_i32_0 : i32, i32
  }
  func.func @transform_9(%arg0: i32) -> (i32, i32) {
    %c0_i32 = arith.constant 0 : i32
    %c0_i32_0 = arith.constant 0 : i32
    return %arg0, %c0_i32 : i32, i32
  }
}

</mosaic_0001>

<llo_original>
// kernel: actor_forward.1
$region0: #{actor_forward.1}
  #allocation0 [shape = 'u32[]', space=smem, size = 0x4, offset = 0x4, fixed_abs, tag = 'smem constant byte address 0x4 - core index']
  #allocation1 [shape = 'u32[144,128]{1,0:T(1,128)}', space=vmem, size = 0x12000, scoped, tag = 'internal scratch']
  %s0 = inlined_call_operand.vmem [shape: f32[16,128], index: 0, kind: input, shape index: {}]
  %s1 = inlined_call_operand.hbm [shape: bf16[128,256], index: 1, kind: input, shape index: {}]
  %s2 = inlined_call_operand.vmem [shape: f32[1,256], index: 2, kind: input, shape index: {}]
  %s3 = inlined_call_operand.hbm [shape: bf16[256,512], index: 3, kind: input, shape index: {}]
  %s4 = inlined_call_operand.vmem [shape: f32[1,512], index: 4, kind: input, shape index: {}]
  %s5 = inlined_call_operand.hbm [shape: bf16[512,128], index: 5, kind: input, shape index: {}]
  %s6 = inlined_call_operand.vmem [shape: f32[1,128], index: 6, kind: input, shape index: {}]
  %s7 = inlined_call_operand.vmem [shape: f32[1,128], index: 7, kind: input, shape index: {}]
  %s8 = inlined_call_operand.vmem [shape: f32[1,128], index: 8, kind: input, shape index: {}]
  %s9 = inlined_call_operand.vmem [shape: bf16[16,128], index: 9, kind: output, shape index: {}]
  %s10 = sld [smem:[#allocation0]]
  $region58: #{actor_forward.1} parent=0
    _
  %s12 = ssub.s32 1, %s10
  %s13 = scalar_select 0, %s12, %s10
  $region1: #{actor_forward.1} parent=0
    #allocation2 [shape = 'u8[65536]{0}', space=vmem, size = 0x10000, scoped, tag = 'input window, operand 1, single buffered']
    #allocation3 [shape = 's32[1]{0}', space=sflag, size = 0x4, scoped, tag = 'scoped memory for actor_forward.1']
    #allocation4 [shape = 'u8[262144]{0}', space=vmem, size = 0x40000, scoped, tag = 'input window, operand 3, single buffered']
    #allocation5 [shape = 's32[1]{0}', space=sflag, size = 0x4, scoped, tag = 'scoped memory for actor_forward.1']
    #allocation6 [shape = 'u8[131072]{0}', space=vmem, size = 0x20000, scoped, tag = 'input window, operand 5, single buffered']
    %14 = vsyncpa [#allocation3], 0
    %15 = vsyncpa [#allocation5], 0
    // Predicated region
    $region2: #{actor_forward.1} parent=1 // pred_check
      _
    $region3: #{actor_forward.1} parent=1 // pred_check_branch
      %17 = sbr.rel (0) target = $region5
    $region4: #{actor_forward.1} parent=1 // pred_region
      _
    $region5: #{actor_forward.1} parent=1 // pred_fallthru
      _
    // Predicated region
    $region6: #{actor_forward.1} parent=1 // pred_check
      _
    $region7: #{actor_forward.1} parent=1 // pred_check_branch
      %19 = sbr.rel (0) target = $region9
    $region8: #{actor_forward.1} parent=1 // pred_region
      %s21 = ssub.s32 2048, 2048
      %22 = vsyncadd [#allocation3], %s21
      %s23 = sshll.u32 [#allocation2], 4
      %s24 = int_to_ptr.vmem [resolvable:$true] %s23
      %29 = dma.hbm_to_vmem [thread:$0]  %s1, 2048, %s24, [#allocation3], 128, 128, 8
    $region9: #{actor_forward.1} parent=1 // pred_fallthru
      _
    // Predicated region
    $region10: #{actor_forward.1} parent=1 // pred_check
      _
    $region11: #{actor_forward.1} parent=1 // pred_check_branch
      %31 = sbr.rel (0) target = $region13
    $region12: #{actor_forward.1} parent=1 // pred_region
      _
    $region13: #{actor_forward.1} parent=1 // pred_fallthru
      _
    // Predicated region
    $region14: #{actor_forward.1} parent=1 // pred_check
      _
    $region15: #{actor_forward.1} parent=1 // pred_check_branch
      %33 = sbr.rel (0) target = $region17
    $region16: #{actor_forward.1} parent=1 // pred_region
      %s35 = ssub.s32 8192, 8192
      %36 = vsyncadd [#allocation5], %s35
      %s37 = sshll.u32 [#allocation4], 4
      %s38 = int_to_ptr.vmem [resolvable:$true] %s37
      %43 = dma.hbm_to_vmem [thread:$0]  %s3, 8192, %s38, [#allocation5], 256, 256, 16
    $region17: #{actor_forward.1} parent=1 // pred_fallthru
      _
    // Predicated region
    $region18: #{actor_forward.1} parent=1 // pred_check
      _
    $region19: #{actor_forward.1} parent=1 // pred_check_branch
      %45 = sbr.rel (0) target = $region21
    $region20: #{actor_forward.1} parent=1 // pred_region
      _
    $region21: #{actor_forward.1} parent=1 // pred_fallthru
      _
    // Predicated region
    $region22: #{actor_forward.1} parent=1 // pred_check
      _
    $region23: #{actor_forward.1} parent=1 // pred_check_branch
      %47 = sbr.rel (0) target = $region25
    $region24: #{actor_forward.1} parent=1 // pred_region
      %s49 = ssub.s32 4096, 4096
      %50 = vsyncadd [#allocation5], %s49
      %s51 = sshll.u32 [#allocation6], 4
      %s52 = int_to_ptr.vmem [resolvable:$true] %s51
      %57 = dma.hbm_to_vmem [thread:$0]  %s5, 4096, %s52, [#allocation5], 64, 64, 4
    $region25: #{actor_forward.1} parent=1 // pred_fallthru
      _
    // Predicated region
    $region26: #{actor_forward.1} parent=1 // pred_check
      _
    $region27: #{actor_forward.1} parent=1 // pred_check_branch
      %59 = sbr.rel (0) target = $region29
    $region28: #{actor_forward.1} parent=1 // pred_region
      _
    $region29: #{actor_forward.1} parent=1 // pred_fallthru
      _
    // Predicated region
    $region30: #{actor_forward.1} parent=1 // pred_check
      _
    $region31: #{actor_forward.1} parent=1 // pred_check_branch
      %61 = sbr.rel (0) target = $region33
    $region32: #{actor_forward.1} parent=1 // pred_region
      _
    $region33: #{actor_forward.1} parent=1 // pred_fallthru
      _
    // Predicated region
    $region34: #{actor_forward.1} parent=1 // pred_check
      _
    $region35: #{actor_forward.1} parent=1 // pred_check_branch
      %63 = sbr.rel (0) target = $region37
    $region36: #{actor_forward.1} parent=1 // pred_region
      _
    $region37: #{actor_forward.1} parent=1 // pred_fallthru
      _
    // Predicated region
    $region38: #{actor_forward.1} parent=1 // pred_check
      _
    $region39: #{actor_forward.1} parent=1 // pred_check_branch
      %65 = sbr.rel (0) target = $region41
    $region40: #{actor_forward.1} parent=1 // pred_region
      %66 = dma.done [#allocation3], 2048
    $region41: #{actor_forward.1} parent=1 // pred_fallthru
      _
    // Predicated region
    $region42: #{actor_forward.1} parent=1 // pred_check
      _
    $region43: #{actor_forward.1} parent=1 // pred_check_branch
      %68 = sbr.rel (0) target = $region45
    $region44: #{actor_forward.1} parent=1 // pred_region
      %69 = dma.done [#allocation5], 8192
    $region45: #{actor_forward.1} parent=1 // pred_fallthru
      _
    // Predicated region
    $region46: #{actor_forward.1} parent=1 // pred_check
      _
    $region47: #{actor_forward.1} parent=1 // pred_check_branch
      %71 = sbr.rel (0) target = $region49
    $region48: #{actor_forward.1} parent=1 // pred_region
      %72 = dma.done [#allocation5], 4096
    $region49: #{actor_forward.1} parent=1 // pred_fallthru
      _
    %v74 = vld [vmem:[%s0] sm:$0xff]
    %v75 = vld [vmem:[%s0 + $0x8] sm:$0xff]
    %v76 = vpack.c.bf16 %v75, %v74
    %v77 = vld [vmem:[#allocation2] sm:$0xff]
    %v78 = vld [vmem:[#allocation2 + $0x8] sm:$0xff]
    %v79 = vld [vmem:[#allocation2 + $0x10] sm:$0xff]
    %v80 = vld [vmem:[#allocation2 + $0x18] sm:$0xff]
    %v81 = vld [vmem:[#allocation2 + $0x20] sm:$0xff]
    %v82 = vld [vmem:[#allocation2 + $0x28] sm:$0xff]
    %v83 = vld [vmem:[#allocation2 + $0x30] sm:$0xff]
    %v84 = vld [vmem:[#allocation2 + $0x38] sm:$0xff]
    %v85 = vld [vmem:[#allocation2 + $0x40] sm:$0xff]
    %v86 = vld [vmem:[#allocation2 + $0x48] sm:$0xff]
    %v87 = vld [vmem:[#allocation2 + $0x50] sm:$0xff]
    %v88 = vld [vmem:[#allocation2 + $0x58] sm:$0xff]
    %v89 = vld [vmem:[#allocation2 + $0x60] sm:$0xff]
    %v90 = vld [vmem:[#allocation2 + $0x68] sm:$0xff]
    %v91 = vld [vmem:[#allocation2 + $0x70] sm:$0xff]
    %v92 = vld [vmem:[#allocation2 + $0x78] sm:$0xff]
    %v93 = vld [vmem:[%s2] sm:$0x3]
    %v95 = vlaneseq
    %v96 = vshrl.u32 %v95, 7
    %v97 = vsub.s32 0, %v96
    %v98 = vrot.slane %v93, %v97
    %v99 = vlaneseq
    %v100 = vshrl.u32 %v99, 7
    %v101 = vsub.s32 1, %v100
    %v102 = vrot.slane %v93, %v101
    %v121 = vunpack.c.l.b16 %v77
    %v122 = vunpack.c.h.b16 %v77
    %v123 = vunpack.c.l.b16 %v78
    %v124 = vunpack.c.h.b16 %v78
    %v125 = vunpack.c.l.b16 %v79
    %v126 = vunpack.c.h.b16 %v79
    %v127 = vunpack.c.l.b16 %v80
    %v128 = vunpack.c.h.b16 %v80
    %v129 = vunpack.c.l.b16 %v81
    %v130 = vunpack.c.h.b16 %v81
    %v131 = vunpack.c.l.b16 %v82
    %v132 = vunpack.c.h.b16 %v82
    %v133 = vunpack.c.l.b16 %v83
    %v134 = vunpack.c.h.b16 %v83
    %v135 = vunpack.c.l.b16 %v84
    %v136 = vunpack.c.h.b16 %v84
    %v137 = vunpack.c.l.b16 %v85
    %v138 = vunpack.c.h.b16 %v85
    %v139 = vunpack.c.l.b16 %v86
    %v140 = vunpack.c.h.b16 %v86
    %v141 = vunpack.c.l.b16 %v87
    %v142 = vunpack.c.h.b16 %v87
    %v143 = vunpack.c.l.b16 %v88
    %v144 = vunpack.c.h.b16 %v88
    %v145 = vunpack.c.l.b16 %v89
    %v146 = vunpack.c.h.b16 %v89
    %v147 = vunpack.c.l.b16 %v90
    %v148 = vunpack.c.h.b16 %v90
    %v149 = vunpack.c.l.b16 %v91
    %v150 = vunpack.c.h.b16 %v91
    %v151 = vunpack.c.l.b16 %v92
    %v152 = vunpack.c.h.b16 %v92
    %v153 = vpack.c.b16 %v123, %v121
    %v154 = vpack.c.b16 %v124, %v122
    %v155 = vpack.c.b16 %v127, %v125
    %v156 = vpack.c.b16 %v128, %v126
    %v157 = vpack.c.b16 %v131, %v129
    %v158 = vpack.c.b16 %v132, %v130
    %v159 = vpack.c.b16 %v135, %v133
    %v160 = vpack.c.b16 %v136, %v134
    %v161 = vpack.c.b16 %v139, %v137
    %v162 = vpack.c.b16 %v140, %v138
    %v163 = vpack.c.b16 %v143, %v141
    %v164 = vpack.c.b16 %v144, %v142
    %v165 = vpack.c.b16 %v147, %v145
    %v166 = vpack.c.b16 %v148, %v146
    %v167 = vpack.c.b16 %v151, %v149
    %v168 = vpack.c.b16 %v152, %v150
    %185 = vmatprep.subr.bf16.mxu0 %v154
    %186 = vmatpush1.bf16.msra.mxu0 %v153
    %187 = vmatprep.subr.bf16.mxu0 %v156
    %188 = vmatpush1.bf16.msra.mxu0 %v155
    %189 = vmatprep.subr.bf16.mxu0 %v158
    %190 = vmatpush1.bf16.msra.mxu0 %v157
    %191 = vmatprep.subr.bf16.mxu0 %v160
    %192 = vmatpush1.bf16.msra.mxu0 %v159
    %193 = vmatprep.subr.bf16.mxu0 %v162
    %194 = vmatpush1.bf16.msra.mxu0 %v161
    %195 = vmatprep.subr.bf16.mxu0 %v164
    %196 = vmatpush1.bf16.msra.mxu0 %v163
    %197 = vmatprep.subr.bf16.mxu0 %v166
    %198 = vmatpush1.bf16.msra.mxu0 %v165
    %199 = vmatprep.subr.bf16.mxu0 %v168
    %200 = vmatpush1.bf16.msra.mxu0 %v167
    %201 = vmatprep.subr.bf16.mxu0 0
    %202 = vmatpush1.bf16.msra.mxu0 0
    %203 = vmatprep.subr.bf16.mxu0 0
    %204 = vmatpush1.bf16.msra.mxu0 0
    %205 = vmatprep.subr.bf16.mxu0 0
    %206 = vmatpush1.bf16.msra.mxu0 0
    %207 = vmatprep.subr.bf16.mxu0 0
    %208 = vmatpush1.bf16.msra.mxu0 0
    %209 = vmatprep.subr.bf16.mxu0 0
    %210 = vmatpush1.bf16.msra.mxu0 0
    %211 = vmatprep.subr.bf16.mxu0 0
    %212 = vmatpush1.bf16.msra.mxu0 0
    %213 = vmatprep.subr.bf16.mxu0 0
    %214 = vmatpush1.bf16.msra.mxu0 0
    %215 = vmatprep.subr.bf16.mxu0 0
    %216 = vmatpush1.bf16.msra.mxu0 0
    %217 = vmatprep.mubr.bf16.mxu0 0
    %218 = vmatmul.mubr.bf16.gmra.mrb[0].mxu0 %v76
    %v219 = vpop.f32.mrb[0].mxu0
    %v220 = vadd.f32 %v98, %v219
    %v221 = vpop.f32.mrb[0].mxu0
    %v222 = vadd.f32 %v102, %v221
    %v223 = vpop.f32.mrb[0].mxu0
    %v224 = vadd.f32 %v98, %v223
    %v225 = vpop.f32.mrb[0].mxu0
    %v226 = vadd.f32 %v102, %v225
    %227 = vdwg.mxu0
    %v228 = vmax.f32 %v220, 0.0
    %v229 = vmax.f32 %v222, 0.0
    %v230 = vmax.f32 %v224, 0.0
    %v231 = vmax.f32 %v226, 0.0
    %v232 = vpack.c.bf16 %v230, %v228
    %v233 = vpack.c.bf16 %v231, %v229
    %v234 = vld [vmem:[#allocation4] sm:$0xff]
    %v235 = vld [vmem:[#allocation4 + $0x8] sm:$0xff]
    %v236 = vld [vmem:[#allocation4 + $0x10] sm:$0xff]
    %v237 = vld [vmem:[#allocation4 + $0x18] sm:$0xff]
    %v238 = vld [vmem:[#allocation4 + $0x20] sm:$0xff]
    %v239 = vld [vmem:[#allocation4 + $0x28] sm:$0xff]
    %v240 = vld [vmem:[#allocation4 + $0x30] sm:$0xff]
    %v241 = vld [vmem:[#allocation4 + $0x38] sm:$0xff]
    %v242 = vld [vmem:[#allocation4 + $0x40] sm:$0xff]
    %v243 = vld [vmem:[#allocation4 + $0x48] sm:$0xff]
    %v244 = vld [vmem:[#allocation4 + $0x50] sm:$0xff]
    %v245 = vld [vmem:[#allocation4 + $0x58] sm:$0xff]
    %v246 = vld [vmem:[#allocation4 + $0x60] sm:$0xff]
    %v247 = vld [vmem:[#allocation4 + $0x68] sm:$0xff]
    %v248 = vld [vmem:[#allocation4 + $0x70] sm:$0xff]
    %v249 = vld [vmem:[#allocation4 + $0x78] sm:$0xff]
    %v250 = vld [vmem:[#allocation4 + $0x80] sm:$0xff]
    %v251 = vld [vmem:[#allocation4 + $0x88] sm:$0xff]
    %v252 = vld [vmem:[#allocation4 + $0x90] sm:$0xff]
    %v253 = vld [vmem:[#allocation4 + $0x98] sm:$0xff]
    %v254 = vld [vmem:[#allocation4 + $0xa0] sm:$0xff]
    %v255 = vld [vmem:[#allocation4 + $0xa8] sm:$0xff]
    %v256 = vld [vmem:[#allocation4 + $0xb0] sm:$0xff]
    %v257 = vld [vmem:[#allocation4 + $0xb8] sm:$0xff]
    %v258 = vld [vmem:[#allocation4 + $0xc0] sm:$0xff]
    %v259 = vld [vmem:[#allocation4 + $0xc8] sm:$0xff]
    %v260 = vld [vmem:[#allocation4 + $0xd0] sm:$0xff]
    %v261 = vld [vmem:[#allocation4 + $0xd8] sm:$0xff]
    %v262 = vld [vmem:[#allocation4 + $0xe0] sm:$0xff]
    %v263 = vld [vmem:[#allocation4 + $0xe8] sm:$0xff]
    %v264 = vld [vmem:[#allocation4 + $0xf0] sm:$0xff]
    %v265 = vld [vmem:[#allocation4 + $0xf8] sm:$0xff]
    %v266 = vld [vmem:[#allocation4 + $0x100] sm:$0xff]
    %v267 = vld [vmem:[#allocation4 + $0x108] sm:$0xff]
    %v268 = vld [vmem:[#allocation4 + $0x110] sm:$0xff]
    %v269 = vld [vmem:[#allocation4 + $0x118] sm:$0xff]
    %v270 = vld [vmem:[#allocation4 + $0x120] sm:$0xff]
    %v271 = vld [vmem:[#allocation4 + $0x128] sm:$0xff]
    %v272 = vld [vmem:[#allocation4 + $0x130] sm:$0xff]
    %v273 = vld [vmem:[#allocation4 + $0x138] sm:$0xff]
    %v274 = vld [vmem:[#allocation4 + $0x140] sm:$0xff]
    %v275 = vld [vmem:[#allocation4 + $0x148] sm:$0xff]
    %v276 = vld [vmem:[#allocation4 + $0x150] sm:$0xff]
    %v277 = vld [vmem:[#allocation4 + $0x158] sm:$0xff]
    %v278 = vld [vmem:[#allocation4 + $0x160] sm:$0xff]
    %v279 = vld [vmem:[#allocation4 + $0x168] sm:$0xff]
    %v280 = vld [vmem:[#allocation4 + $0x170] sm:$0xff]
    %v281 = vld [vmem:[#allocation4 + $0x178] sm:$0xff]
    %v282 = vld [vmem:[#allocation4 + $0x180] sm:$0xff]
    %v283 = vld [vmem:[#allocation4 + $0x188] sm:$0xff]
    %v284 = vld [vmem:[#allocation4 + $0x190] sm:$0xff]
    %v285 = vld [vmem:[#allocation4 + $0x198] sm:$0xff]
    %v286 = vld [vmem:[#allocation4 + $0x1a0] sm:$0xff]
    %v287 = vld [vmem:[#allocation4 + $0x1a8] sm:$0xff]
    %v288 = vld [vmem:[#allocation4 + $0x1b0] sm:$0xff]
    %v289 = vld [vmem:[#allocation4 + $0x1b8] sm:$0xff]
    %v290 = vld [vmem:[#allocation4 + $0x1c0] sm:$0xff]
    %v291 = vld [vmem:[#allocation4 + $0x1c8] sm:$0xff]
    %v292 = vld [vmem:[#allocation4 + $0x1d0] sm:$0xff]
    %v293 = vld [vmem:[#allocation4 + $0x1d8] sm:$0xff]
    %v294 = vld [vmem:[#allocation4 + $0x1e0] sm:$0xff]
    %v295 = vld [vmem:[#allocation4 + $0x1e8] sm:$0xff]
    %v296 = vld [vmem:[#allocation4 + $0x1f0] sm:$0xff]
    %v297 = vld [vmem:[#allocation4 + $0x1f8] sm:$0xff]
    %v298 = vld [vmem:[%s4] sm:$0xf]
    %v300 = vlaneseq
    %v301 = vshrl.u32 %v300, 7
    %v302 = vsub.s32 0, %v301
    %v303 = vrot.slane %v298, %v302
    %v304 = vlaneseq
    %v305 = vshrl.u32 %v304, 7
    %v306 = vsub.s32 1, %v305
    %v307 = vrot.slane %v298, %v306
    %v308 = vlaneseq
    %v309 = vshrl.u32 %v308, 7
    %v310 = vsub.s32 2, %v309
    %v311 = vrot.slane %v298, %v310
    %v312 = vlaneseq
    %v313 = vshrl.u32 %v312, 7
    %v314 = vsub.s32 3, %v313
    %v315 = vrot.slane %v298, %v314
    %v384 = vunpack.c.l.b16 %v234
    %v385 = vunpack.c.h.b16 %v234
    %v386 = vunpack.c.l.b16 %v235
    %v387 = vunpack.c.h.b16 %v235
    %v388 = vunpack.c.l.b16 %v236
    %v389 = vunpack.c.h.b16 %v236
    %v390 = vunpack.c.l.b16 %v237
    %v391 = vunpack.c.h.b16 %v237
    %v392 = vunpack.c.l.b16 %v238
    %v393 = vunpack.c.h.b16 %v238
    %v394 = vunpack.c.l.b16 %v239
    %v395 = vunpack.c.h.b16 %v239
    %v396 = vunpack.c.l.b16 %v240
    %v397 = vunpack.c.h.b16 %v240
    %v398 = vunpack.c.l.b16 %v241
    %v399 = vunpack.c.h.b16 %v241
    %v400 = vunpack.c.l.b16 %v242
    %v401 = vunpack.c.h.b16 %v242
    %v402 = vunpack.c.l.b16 %v243
    %v403 = vunpack.c.h.b16 %v243
    %v404 = vunpack.c.l.b16 %v244
    %v405 = vunpack.c.h.b16 %v244
    %v406 = vunpack.c.l.b16 %v245
    %v407 = vunpack.c.h.b16 %v245
    %v408 = vunpack.c.l.b16 %v246
    %v409 = vunpack.c.h.b16 %v246
    %v410 = vunpack.c.l.b16 %v247
    %v411 = vunpack.c.h.b16 %v247
    %v412 = vunpack.c.l.b16 %v248
    %v413 = vunpack.c.h.b16 %v248
    %v414 = vunpack.c.l.b16 %v249
    %v415 = vunpack.c.h.b16 %v249
    %v416 = vunpack.c.l.b16 %v250
    %v417 = vunpack.c.h.b16 %v250
    %v418 = vunpack.c.l.b16 %v251
    %v419 = vunpack.c.h.b16 %v251
    %v420 = vunpack.c.l.b16 %v252
    %v421 = vunpack.c.h.b16 %v252
    %v422 = vunpack.c.l.b16 %v253
    %v423 = vunpack.c.h.b16 %v253
    %v424 = vunpack.c.l.b16 %v254
    %v425 = vunpack.c.h.b16 %v254
    %v426 = vunpack.c.l.b16 %v255
    %v427 = vunpack.c.h.b16 %v255
    %v428 = vunpack.c.l.b16 %v256
    %v429 = vunpack.c.h.b16 %v256
    %v430 = vunpack.c.l.b16 %v257
    %v431 = vunpack.c.h.b16 %v257
    %v432 = vunpack.c.l.b16 %v258
    %v433 = vunpack.c.h.b16 %v258
    %v434 = vunpack.c.l.b16 %v259
    %v435 = vunpack.c.h.b16 %v259
    %v436 = vunpack.c.l.b16 %v260
    %v437 = vunpack.c.h.b16 %v260
    %v438 = vunpack.c.l.b16 %v261
    %v439 = vunpack.c.h.b16 %v261
    %v440 = vunpack.c.l.b16 %v262
    %v441 = vunpack.c.h.b16 %v262
    %v442 = vunpack.c.l.b16 %v263
    %v443 = vunpack.c.h.b16 %v263
    %v444 = vunpack.c.l.b16 %v264
    %v445 = vunpack.c.h.b16 %v264
    %v446 = vunpack.c.l.b16 %v265
    %v447 = vunpack.c.h.b16 %v265
    %v448 = vunpack.c.l.b16 %v266
    %v449 = vunpack.c.h.b16 %v266
    %v450 = vunpack.c.l.b16 %v267
    %v451 = vunpack.c.h.b16 %v267
    %v452 = vunpack.c.l.b16 %v268
    %v453 = vunpack.c.h.b16 %v268
    %v454 = vunpack.c.l.b16 %v269
    %v455 = vunpack.c.h.b16 %v269
    %v456 = vunpack.c.l.b16 %v270
    %v457 = vunpack.c.h.b16 %v270
    %v458 = vunpack.c.l.b16 %v271
    %v459 = vunpack.c.h.b16 %v271
    %v460 = vunpack.c.l.b16 %v272
    %v461 = vunpack.c.h.b16 %v272
    %v462 = vunpack.c.l.b16 %v273
    %v463 = vunpack.c.h.b16 %v273
    %v464 = vunpack.c.l.b16 %v274
    %v465 = vunpack.c.h.b16 %v274
    %v466 = vunpack.c.l.b16 %v275
    %v467 = vunpack.c.h.b16 %v275
    %v468 = vunpack.c.l.b16 %v276
    %v469 = vunpack.c.h.b16 %v276
    %v470 = vunpack.c.l.b16 %v277
    %v471 = vunpack.c.h.b16 %v277
    %v472 = vunpack.c.l.b16 %v278
    %v473 = vunpack.c.h.b16 %v278
    %v474 = vunpack.c.l.b16 %v279
    %v475 = vunpack.c.h.b16 %v279
    %v476 = vunpack.c.l.b16 %v280
    %v477 = vunpack.c.h.b16 %v280
    %v478 = vunpack.c.l.b16 %v281
    %v479 = vunpack.c.h.b16 %v281
    %v480 = vunpack.c.l.b16 %v282
    %v481 = vunpack.c.h.b16 %v282
    %v482 = vunpack.c.l.b16 %v283
    %v483 = vunpack.c.h.b16 %v283
    %v484 = vunpack.c.l.b16 %v284
    %v485 = vunpack.c.h.b16 %v284
    %v486 = vunpack.c.l.b16 %v285
    %v487 = vunpack.c.h.b16 %v285
    %v488 = vunpack.c.l.b16 %v286
    %v489 = vunpack.c.h.b16 %v286
    %v490 = vunpack.c.l.b16 %v287
    %v491 = vunpack.c.h.b16 %v287
    %v492 = vunpack.c.l.b16 %v288
    %v493 = vunpack.c.h.b16 %v288
    %v494 = vunpack.c.l.b16 %v289
    %v495 = vunpack.c.h.b16 %v289
    %v496 = vunpack.c.l.b16 %v290
    %v497 = vunpack.c.h.b16 %v290
    %v498 = vunpack.c.l.b16 %v291
    %v499 = vunpack.c.h.b16 %v291
    %v500 = vunpack.c.l.b16 %v292
    %v501 = vunpack.c.h.b16 %v292
    %v502 = vunpack.c.l.b16 %v293
    %v503 = vunpack.c.h.b16 %v293
    %v504 = vunpack.c.l.b16 %v294
    %v505 = vunpack.c.h.b16 %v294
    %v506 = vunpack.c.l.b16 %v295
    %v507 = vunpack.c.h.b16 %v295
    %v508 = vunpack.c.l.b16 %v296
    %v509 = vunpack.c.h.b16 %v296
    %v510 = vunpack.c.l.b16 %v297
    %v511 = vunpack.c.h.b16 %v297
    %v512 = vpack.c.b16 %v388, %v384
    %v513 = vpack.c.b16 %v389, %v385
    %v514 = vpack.c.b16 %v390, %v386
    %v515 = vpack.c.b16 %v391, %v387
    %v516 = vpack.c.b16 %v396, %v392
    %v517 = vpack.c.b16 %v397, %v393
    %v518 = vpack.c.b16 %v398, %v394
    %v519 = vpack.c.b16 %v399, %v395
    %v520 = vpack.c.b16 %v404, %v400
    %v521 = vpack.c.b16 %v405, %v401
    %v522 = vpack.c.b16 %v406, %v402
    %v523 = vpack.c.b16 %v407, %v403
    %v524 = vpack.c.b16 %v412, %v408
    %v525 = vpack.c.b16 %v413, %v409
    %v526 = vpack.c.b16 %v414, %v410
    %v527 = vpack.c.b16 %v415, %v411
    %v528 = vpack.c.b16 %v420, %v416
    %v529 = vpack.c.b16 %v421, %v417
    %v530 = vpack.c.b16 %v422, %v418
    %v531 = vpack.c.b16 %v423, %v419
    %v532 = vpack.c.b16 %v428, %v424
    %v533 = vpack.c.b16 %v429, %v425
    %v534 = vpack.c.b16 %v430, %v426
    %v535 = vpack.c.b16 %v431, %v427
    %v536 = vpack.c.b16 %v436, %v432
    %v537 = vpack.c.b16 %v437, %v433
    %v538 = vpack.c.b16 %v438, %v434
    %v539 = vpack.c.b16 %v439, %v435
    %v540 = vpack.c.b16 %v444, %v440
    %v541 = vpack.c.b16 %v445, %v441
    %v542 = vpack.c.b16 %v446, %v442
    %v543 = vpack.c.b16 %v447, %v443
    %v544 = vpack.c.b16 %v452, %v448
    %v545 = vpack.c.b16 %v453, %v449
    %v546 = vpack.c.b16 %v454, %v450
    %v547 = vpack.c.b16 %v455, %v451
    %v548 = vpack.c.b16 %v460, %v456
    %v549 = vpack.c.b16 %v461, %v457
    %v550 = vpack.c.b16 %v462, %v458
    %v551 = vpack.c.b16 %v463, %v459
    %v552 = vpack.c.b16 %v468, %v464
    %v553 = vpack.c.b16 %v469, %v465
    %v554 = vpack.c.b16 %v470, %v466
    %v555 = vpack.c.b16 %v471, %v467
    %v556 = vpack.c.b16 %v476, %v472
    %v557 = vpack.c.b16 %v477, %v473
    %v558 = vpack.c.b16 %v478, %v474
    %v559 = vpack.c.b16 %v479, %v475
    %v560 = vpack.c.b16 %v484, %v480
    %v561 = vpack.c.b16 %v485, %v481
    %v562 = vpack.c.b16 %v486, %v482
    %v563 = vpack.c.b16 %v487, %v483
    %v564 = vpack.c.b16 %v492, %v488
    %v565 = vpack.c.b16 %v493, %v489
    %v566 = vpack.c.b16 %v494, %v490
    %v567 = vpack.c.b16 %v495, %v491
    %v568 = vpack.c.b16 %v500, %v496
    %v569 = vpack.c.b16 %v501, %v497
    %v570 = vpack.c.b16 %v502, %v498
    %v571 = vpack.c.b16 %v503, %v499
    %v572 = vpack.c.b16 %v508, %v504
    %v573 = vpack.c.b16 %v509, %v505
    %v574 = vpack.c.b16 %v510, %v506
    %v575 = vpack.c.b16 %v511, %v507
    %640 = vmatprep.subr.bf16.mxu0 %v513
    %641 = vmatpush1.bf16.msra.mxu0 %v512
    %642 = vmatprep.subr.bf16.mxu0 %v517
    %643 = vmatpush1.bf16.msra.mxu0 %v516
    %644 = vmatprep.subr.bf16.mxu0 %v521
    %645 = vmatpush1.bf16.msra.mxu0 %v520
    %646 = vmatprep.subr.bf16.mxu0 %v525
    %647 = vmatpush1.bf16.msra.mxu0 %v524
    %648 = vmatprep.subr.bf16.mxu0 %v529
    %649 = vmatpush1.bf16.msra.mxu0 %v528
    %650 = vmatprep.subr.bf16.mxu0 %v533
    %651 = vmatpush1.bf16.msra.mxu0 %v532
    %652 = vmatprep.subr.bf16.mxu0 %v537
    %653 = vmatpush1.bf16.msra.mxu0 %v536
    %654 = vmatprep.subr.bf16.mxu0 %v541
    %655 = vmatpush1.bf16.msra.mxu0 %v540
    %656 = vmatprep.subr.bf16.mxu0 %v545
    %657 = vmatpush1.bf16.msra.mxu0 %v544
    %658 = vmatprep.subr.bf16.mxu0 %v549
    %659 = vmatpush1.bf16.msra.mxu0 %v548
    %660 = vmatprep.subr.bf16.mxu0 %v553
    %661 = vmatpush1.bf16.msra.mxu0 %v552
    %662 = vmatprep.subr.bf16.mxu0 %v557
    %663 = vmatpush1.bf16.msra.mxu0 %v556
    %664 = vmatprep.subr.bf16.mxu0 %v561
    %665 = vmatpush1.bf16.msra.mxu0 %v560
    %666 = vmatprep.subr.bf16.mxu0 %v565
    %667 = vmatpush1.bf16.msra.mxu0 %v564
    %668 = vmatprep.subr.bf16.mxu0 %v569
    %669 = vmatpush1.bf16.msra.mxu0 %v568
    %670 = vmatprep.subr.bf16.mxu0 %v573
    %671 = vmatpush1.bf16.msra.mxu0 %v572
    %672 = vmatprep.mubr.bf16.mxu0 %v233
    %673 = vmatmul.mubr.bf16.gmra.mrb[0].mxu0 %v232
    %v674 = vpop.f32.mrb[0].mxu0
    %v675 = vadd.f32 %v303, %v674
    %v676 = vpop.f32.mrb[0].mxu0
    %v677 = vadd.f32 %v307, %v676
    %v678 = vpop.f32.mrb[0].mxu0
    %v679 = vadd.f32 %v303, %v678
    %v680 = vpop.f32.mrb[0].mxu0
    %v681 = vadd.f32 %v307, %v680
    %682 = vdwg.mxu0
    %683 = vmatprep.subr.bf16.mxu0 %v515
    %684 = vmatpush1.bf16.msra.mxu0 %v514
    %685 = vmatprep.subr.bf16.mxu0 %v519
    %686 = vmatpush1.bf16.msra.mxu0 %v518
    %687 = vmatprep.subr.bf16.mxu0 %v523
    %688 = vmatpush1.bf16.msra.mxu0 %v522
    %689 = vmatprep.subr.bf16.mxu0 %v527
    %690 = vmatpush1.bf16.msra.mxu0 %v526
    %691 = vmatprep.subr.bf16.mxu0 %v531
    %692 = vmatpush1.bf16.msra.mxu0 %v530
    %693 = vmatprep.subr.bf16.mxu0 %v535
    %694 = vmatpush1.bf16.msra.mxu0 %v534
    %695 = vmatprep.subr.bf16.mxu0 %v539
    %696 = vmatpush1.bf16.msra.mxu0 %v538
    %697 = vmatprep.subr.bf16.mxu0 %v543
    %698 = vmatpush1.bf16.msra.mxu0 %v542
    %699 = vmatprep.subr.bf16.mxu0 %v547
    %700 = vmatpush1.bf16.msra.mxu0 %v546
    %701 = vmatprep.subr.bf16.mxu0 %v551
    %702 = vmatpush1.bf16.msra.mxu0 %v550
    %703 = vmatprep.subr.bf16.mxu0 %v555
    %704 = vmatpush1.bf16.msra.mxu0 %v554
    %705 = vmatprep.subr.bf16.mxu0 %v559
    %706 = vmatpush1.bf16.msra.mxu0 %v558
    %707 = vmatprep.subr.bf16.mxu0 %v563
    %708 = vmatpush1.bf16.msra.mxu0 %v562
    %709 = vmatprep.subr.bf16.mxu0 %v567
    %710 = vmatpush1.bf16.msra.mxu0 %v566
    %711 = vmatprep.subr.bf16.mxu0 %v571
    %712 = vmatpush1.bf16.msra.mxu0 %v570
    %713 = vmatprep.subr.bf16.mxu0 %v575
    %714 = vmatpush1.bf16.msra.mxu0 %v574
    %715 = vmatprep.mubr.bf16.mxu0 %v233
    %716 = vmatmul.mubr.bf16.gmra.mrb[0].mxu0 %v232
    %v717 = vpop.f32.mrb[0].mxu0
    %v718 = vadd.f32 %v311, %v717
    %v719 = vpop.f32.mrb[0].mxu0
    %v720 = vadd.f32 %v315, %v719
    %v721 = vpop.f32.mrb[0].mxu0
    %v722 = vadd.f32 %v311, %v721
    %v723 = vpop.f32.mrb[0].mxu0
    %v724 = vadd.f32 %v315, %v723
    %725 = vdwg.mxu0
    %v726 = vmax.f32 %v675, 0.0
    %v727 = vmax.f32 %v677, 0.0
    %v728 = vmax.f32 %v718, 0.0
    %v729 = vmax.f32 %v720, 0.0
    %v730 = vmax.f32 %v679, 0.0
    %v731 = vmax.f32 %v681, 0.0
    %v732 = vmax.f32 %v722, 0.0
    %v733 = vmax.f32 %v724, 0.0
    %v734 = vpack.c.bf16 %v730, %v726
    %v735 = vpack.c.bf16 %v731, %v727
    %v736 = vpack.c.bf16 %v732, %v728
    %v737 = vpack.c.bf16 %v733, %v729
    %v738 = vld [vmem:[#allocation6] sm:$0xf]
    %v739 = vld [vmem:[#allocation6 + $0x4] sm:$0xf]
    %v740 = vld [vmem:[#allocation6 + $0x8] sm:$0xf]
    %v741 = vld [vmem:[#allocation6 + $0xc] sm:$0xf]
    %v742 = vld [vmem:[#allocation6 + $0x10] sm:$0xf]
    %v743 = vld [vmem:[#allocation6 + $0x14] sm:$0xf]
    %v744 = vld [vmem:[#allocation6 + $0x18] sm:$0xf]
    %v745 = vld [vmem:[#allocation6 + $0x1c] sm:$0xf]
    %v746 = vld [vmem:[#allocation6 + $0x20] sm:$0xf]
    %v747 = vld [vmem:[#allocation6 + $0x24] sm:$0xf]
    %v748 = vld [vmem:[#allocation6 + $0x28] sm:$0xf]
    %v749 = vld [vmem:[#allocation6 + $0x2c] sm:$0xf]
    %v750 = vld [vmem:[#allocation6 + $0x30] sm:$0xf]
    %v751 = vld [vmem:[#allocation6 + $0x34] sm:$0xf]
    %v752 = vld [vmem:[#allocation6 + $0x38] sm:$0xf]
    %v753 = vld [vmem:[#allocation6 + $0x3c] sm:$0xf]
    %v754 = vld [vmem:[#allocation6 + $0x40] sm:$0xf]
    %v755 = vld [vmem:[#allocation6 + $0x44] sm:$0xf]
    %v756 = vld [vmem:[#allocation6 + $0x48] sm:$0xf]
    %v757 = vld [vmem:[#allocation6 + $0x4c] sm:$0xf]
    %v758 = vld [vmem:[#allocation6 + $0x50] sm:$0xf]
    %v759 = vld [vmem:[#allocation6 + $0x54] sm:$0xf]
    %v760 = vld [vmem:[#allocation6 + $0x58] sm:$0xf]
    %v761 = vld [vmem:[#allocation6 + $0x5c] sm:$0xf]
    %v762 = vld [vmem:[#allocation6 + $0x60] sm:$0xf]
    %v763 = vld [vmem:[#allocation6 + $0x64] sm:$0xf]
    %v764 = vld [vmem:[#allocation6 + $0x68] sm:$0xf]
    %v765 = vld [vmem:[#allocation6 + $0x6c] sm:$0xf]
    %v766 = vld [vmem:[#allocation6 + $0x70] sm:$0xf]
    %v767 = vld [vmem:[#allocation6 + $0x74] sm:$0xf]
    %v768 = vld [vmem:[#allocation6 + $0x78] sm:$0xf]
    %v769 = vld [vmem:[#allocation6 + $0x7c] sm:$0xf]
    %v770 = vld [vmem:[#allocation6 + $0x80] sm:$0xf]
    %v771 = vld [vmem:[#allocation6 + $0x84] sm:$0xf]
    %v772 = vld [vmem:[#allocation6 + $0x88] sm:$0xf]
    %v773 = vld [vmem:[#allocation6 + $0x8c] sm:$0xf]
    %v774 = vld [vmem:[#allocation6 + $0x90] sm:$0xf]
    %v775 = vld [vmem:[#allocation6 + $0x94] sm:$0xf]
    %v776 = vld [vmem:[#allocation6 + $0x98] sm:$0xf]
    %v777 = vld [vmem:[#allocation6 + $0x9c] sm:$0xf]
    %v778 = vld [vmem:[#allocation6 + $0xa0] sm:$0xf]
    %v779 = vld [vmem:[#allocation6 + $0xa4] sm:$0xf]
    %v780 = vld [vmem:[#allocation6 + $0xa8] sm:$0xf]
    %v781 = vld [vmem:[#allocation6 + $0xac] sm:$0xf]
    %v782 = vld [vmem:[#allocation6 + $0xb0] sm:$0xf]
    %v783 = vld [vmem:[#allocation6 + $0xb4] sm:$0xf]
    %v784 = vld [vmem:[#allocation6 + $0xb8] sm:$0xf]
    %v785 = vld [vmem:[#allocation6 + $0xbc] sm:$0xf]
    %v786 = vld [vmem:[#allocation6 + $0xc0] sm:$0xf]
    %v787 = vld [vmem:[#allocation6 + $0xc4] sm:$0xf]
    %v788 = vld [vmem:[#allocation6 + $0xc8] sm:$0xf]
    %v789 = vld [vmem:[#allocation6 + $0xcc] sm:$0xf]
    %v790 = vld [vmem:[#allocation6 + $0xd0] sm:$0xf]
    %v791 = vld [vmem:[#allocation6 + $0xd4] sm:$0xf]
    %v792 = vld [vmem:[#allocation6 + $0xd8] sm:$0xf]
    %v793 = vld [vmem:[#allocation6 + $0xdc] sm:$0xf]
    %v794 = vld [vmem:[#allocation6 + $0xe0] sm:$0xf]
    %v795 = vld [vmem:[#allocation6 + $0xe4] sm:$0xf]
    %v796 = vld [vmem:[#allocation6 + $0xe8] sm:$0xf]
    %v797 = vld [vmem:[#allocation6 + $0xec] sm:$0xf]
    %v798 = vld [vmem:[#allocation6 + $0xf0] sm:$0xf]
    %v799 = vld [vmem:[#allocation6 + $0xf4] sm:$0xf]
    %v800 = vld [vmem:[#allocation6 + $0xf8] sm:$0xf]
    %v801 = vld [vmem:[#allocation6 + $0xfc] sm:$0xf]
    %v802 = vld [vmem:[%s6] sm:$0x1]
    %v804 = vlaneseq
    %v805 = vshrl.u32 %v804, 7
    %v806 = vsub.s32 0, %v805
    %v807 = vrot.slane %v802, %v806
    %v873 = vunpack.c.l.b16 %v738
    %v874 = vunpack.c.l.b16 %v739
    %v875 = vunpack.c.l.b16 %v740
    %v876 = vunpack.c.l.b16 %v741
    %v877 = vunpack.c.l.b16 %v742
    %v878 = vunpack.c.l.b16 %v743
    %v879 = vunpack.c.l.b16 %v744
    %v880 = vunpack.c.l.b16 %v745
    %v881 = vunpack.c.l.b16 %v746
    %v882 = vunpack.c.l.b16 %v747
    %v883 = vunpack.c.l.b16 %v748
    %v884 = vunpack.c.l.b16 %v749
    %v885 = vunpack.c.l.b16 %v750
    %v886 = vunpack.c.l.b16 %v751
    %v887 = vunpack.c.l.b16 %v752
    %v888 = vunpack.c.l.b16 %v753
    %v889 = vunpack.c.l.b16 %v754
    %v890 = vunpack.c.l.b16 %v755
    %v891 = vunpack.c.l.b16 %v756
    %v892 = vunpack.c.l.b16 %v757
    %v893 = vunpack.c.l.b16 %v758
    %v894 = vunpack.c.l.b16 %v759
    %v895 = vunpack.c.l.b16 %v760
    %v896 = vunpack.c.l.b16 %v761
    %v897 = vunpack.c.l.b16 %v762
    %v898 = vunpack.c.l.b16 %v763
    %v899 = vunpack.c.l.b16 %v764
    %v900 = vunpack.c.l.b16 %v765
    %v901 = vunpack.c.l.b16 %v766
    %v902 = vunpack.c.l.b16 %v767
    %v903 = vunpack.c.l.b16 %v768
    %v904 = vunpack.c.l.b16 %v769
    %v905 = vunpack.c.l.b16 %v770
    %v906 = vunpack.c.l.b16 %v771
    %v907 = vunpack.c.l.b16 %v772
    %v908 = vunpack.c.l.b16 %v773
    %v909 = vunpack.c.l.b16 %v774
    %v910 = vunpack.c.l.b16 %v775
    %v911 = vunpack.c.l.b16 %v776
    %v912 = vunpack.c.l.b16 %v777
    %v913 = vunpack.c.l.b16 %v778
    %v914 = vunpack.c.l.b16 %v779
    %v915 = vunpack.c.l.b16 %v780
    %v916 = vunpack.c.l.b16 %v781
    %v917 = vunpack.c.l.b16 %v782
    %v918 = vunpack.c.l.b16 %v783
    %v919 = vunpack.c.l.b16 %v784
    %v920 = vunpack.c.l.b16 %v785
    %v921 = vunpack.c.l.b16 %v786
    %v922 = vunpack.c.l.b16 %v787
    %v923 = vunpack.c.l.b16 %v788
    %v924 = vunpack.c.l.b16 %v789
    %v925 = vunpack.c.l.b16 %v790
    %v926 = vunpack.c.l.b16 %v791
    %v927 = vunpack.c.l.b16 %v792
    %v928 = vunpack.c.l.b16 %v793
    %v929 = vunpack.c.l.b16 %v794
    %v930 = vunpack.c.l.b16 %v795
    %v931 = vunpack.c.l.b16 %v796
    %v932 = vunpack.c.l.b16 %v797
    %v933 = vunpack.c.l.b16 %v798
    %v934 = vunpack.c.l.b16 %v799
    %v935 = vunpack.c.l.b16 %v800
    %v936 = vunpack.c.l.b16 %v801
    %v937 = vpack.c.b16 %v874, %v873
    %v938 = vpack.c.b16 %v876, %v875
    %v939 = vpack.c.b16 %v878, %v877
    %v940 = vpack.c.b16 %v880, %v879
    %v941 = vpack.c.b16 %v882, %v881
    %v942 = vpack.c.b16 %v884, %v883
    %v943 = vpack.c.b16 %v886, %v885
    %v944 = vpack.c.b16 %v888, %v887
    %v945 = vpack.c.b16 %v890, %v889
    %v946 = vpack.c.b16 %v892, %v891
    %v947 = vpack.c.b16 %v894, %v893
    %v948 = vpack.c.b16 %v896, %v895
    %v949 = vpack.c.b16 %v898, %v897
    %v950 = vpack.c.b16 %v900, %v899
    %v951 = vpack.c.b16 %v902, %v901
    %v952 = vpack.c.b16 %v904, %v903
    %v953 = vpack.c.b16 %v906, %v905
    %v954 = vpack.c.b16 %v908, %v907
    %v955 = vpack.c.b16 %v910, %v909
    %v956 = vpack.c.b16 %v912, %v911
    %v957 = vpack.c.b16 %v914, %v913
    %v958 = vpack.c.b16 %v916, %v915
    %v959 = vpack.c.b16 %v918, %v917
    %v960 = vpack.c.b16 %v920, %v919
    %v961 = vpack.c.b16 %v922, %v921
    %v962 = vpack.c.b16 %v924, %v923
    %v963 = vpack.c.b16 %v926, %v925
    %v964 = vpack.c.b16 %v928, %v927
    %v965 = vpack.c.b16 %v930, %v929
    %v966 = vpack.c.b16 %v932, %v931
    %v967 = vpack.c.b16 %v934, %v933
    %v968 = vpack.c.b16 %v936, %v935
    %1001 = vmatprep.subr.bf16.mxu0 0
    %1002 = vmatpush1.bf16.msra.mxu0 %v937
    %1003 = vmatprep.subr.bf16.mxu0 0
    %1004 = vmatpush1.bf16.msra.mxu0 %v938
    %1005 = vmatprep.subr.bf16.mxu0 0
    %1006 = vmatpush1.bf16.msra.mxu0 %v939
    %1007 = vmatprep.subr.bf16.mxu0 0
    %1008 = vmatpush1.bf16.msra.mxu0 %v940
    %1009 = vmatprep.subr.bf16.mxu0 0
    %1010 = vmatpush1.bf16.msra.mxu0 %v941
    %1011 = vmatprep.subr.bf16.mxu0 0
    %1012 = vmatpush1.bf16.msra.mxu0 %v942
    %1013 = vmatprep.subr.bf16.mxu0 0
    %1014 = vmatpush1.bf16.msra.mxu0 %v943
    %1015 = vmatprep.subr.bf16.mxu0 0
    %1016 = vmatpush1.bf16.msra.mxu0 %v944
    %1017 = vmatprep.subr.bf16.mxu0 0
    %1018 = vmatpush1.bf16.msra.mxu0 %v945
    %1019 = vmatprep.subr.bf16.mxu0 0
    %1020 = vmatpush1.bf16.msra.mxu0 %v946
    %1021 = vmatprep.subr.bf16.mxu0 0
    %1022 = vmatpush1.bf16.msra.mxu0 %v947
    %1023 = vmatprep.subr.bf16.mxu0 0
    %1024 = vmatpush1.bf16.msra.mxu0 %v948
    %1025 = vmatprep.subr.bf16.mxu0 0
    %1026 = vmatpush1.bf16.msra.mxu0 %v949
    %1027 = vmatprep.subr.bf16.mxu0 0
    %1028 = vmatpush1.bf16.msra.mxu0 %v950
    %1029 = vmatprep.subr.bf16.mxu0 0
    %1030 = vmatpush1.bf16.msra.mxu0 %v951
    %1031 = vmatprep.subr.bf16.mxu0 0
    %1032 = vmatpush1.bf16.msra.mxu0 %v952
    %1033 = vmatprep.mubr.bf16.mxu0 %v735
    %1034 = vmatmul.mubr.bf16.gmra.mrb[0].mxu0 %v734
    %v1035 = vpop.f32.mrb[0].mxu0
    %v1036 = vadd.f32 %v807, %v1035
    %v1037 = vpop.f32.mrb[0].mxu0
    %v1038 = vpop.f32.mrb[0].mxu0
    %v1039 = vadd.f32 %v807, %v1038
    %v1040 = vpop.f32.mrb[0].mxu0
    %1041 = vdwg.mxu0
    %1042 = vmatprep.subr.bf16.mxu0 0
    %1043 = vmatpush1.bf16.msra.mxu0 %v953
    %1044 = vmatprep.subr.bf16.mxu0 0
    %1045 = vmatpush1.bf16.msra.mxu0 %v954
    %1046 = vmatprep.subr.bf16.mxu0 0
    %1047 = vmatpush1.bf16.msra.mxu0 %v955
    %1048 = vmatprep.subr.bf16.mxu0 0
    %1049 = vmatpush1.bf16.msra.mxu0 %v956
    %1050 = vmatprep.subr.bf16.mxu0 0
    %1051 = vmatpush1.bf16.msra.mxu0 %v957
    %1052 = vmatprep.subr.bf16.mxu0 0
    %1053 = vmatpush1.bf16.msra.mxu0 %v958
    %1054 = vmatprep.subr.bf16.mxu0 0
    %1055 = vmatpush1.bf16.msra.mxu0 %v959
    %1056 = vmatprep.subr.bf16.mxu0 0
    %1057 = vmatpush1.bf16.msra.mxu0 %v960
    %1058 = vmatprep.subr.bf16.mxu0 0
    %1059 = vmatpush1.bf16.msra.mxu0 %v961
    %1060 = vmatprep.subr.bf16.mxu0 0
    %1061 = vmatpush1.bf16.msra.mxu0 %v962
    %1062 = vmatprep.subr.bf16.mxu0 0
    %1063 = vmatpush1.bf16.msra.mxu0 %v963
    %1064 = vmatprep.subr.bf16.mxu0 0
    %1065 = vmatpush1.bf16.msra.mxu0 %v964
    %1066 = vmatprep.subr.bf16.mxu0 0
    %1067 = vmatpush1.bf16.msra.mxu0 %v965
    %1068 = vmatprep.subr.bf16.mxu0 0
    %1069 = vmatpush1.bf16.msra.mxu0 %v966
    %1070 = vmatprep.subr.bf16.mxu0 0
    %1071 = vmatpush1.bf16.msra.mxu0 %v967
    %1072 = vmatprep.subr.bf16.mxu0 0
    %1073 = vmatpush1.bf16.msra.mxu0 %v968
    %1074 = vmatprep.mubr.bf16.mxu0 %v737
    %1075 = vmatmul.mubr.bf16.gmra.mrb[0].mxu0 %v736
    %v1076 = vpop.f32.mrb[0].mxu0
    %v1077 = vadd.f32 %v1036, %v1076
    %v1078 = vpop.f32.mrb[0].mxu0
    %v1079 = vpop.f32.mrb[0].mxu0
    %v1080 = vadd.f32 %v1039, %v1079
    %v1081 = vpop.f32.mrb[0].mxu0
    %1082 = vdwg.mxu0
    %v1083 = vld [vmem:[%s7] sm:$0x1]
    %v1085 = vlaneseq
    %v1086 = vshrl.u32 %v1085, 7
    %v1087 = vsub.s32 0, %v1086
    %v1088 = vrot.slane %v1083, %v1087
    %v1090 = vmax.f32 %v1077, %v1088
    %v1091 = vmax.f32 %v1080, %v1088
    %v1092 = vld [vmem:[%s8] sm:$0x1]
    %v1094 = vlaneseq
    %v1095 = vshrl.u32 %v1094, 7
    %v1096 = vsub.s32 0, %v1095
    %v1097 = vrot.slane %v1092, %v1096
    %v1099 = vmin.f32 %v1090, %v1097
    %v1100 = vmin.f32 %v1091, %v1097
    %v1101 = vpack.c.bf16 %v1100, %v1099
    %v1103 = vunpack.c.l.b16 %v1101
    %v1104 = vunpack.c.h.b16 %v1101
    %v1105 = vpack.c.b16 %v1103, %v1103
    %v1106 = vpack.c.b16 %v1104, %v1104
    %1109 = vst [vmem:[%s9] sm:$0xf] %v1105
    %1110 = vst [vmem:[%s9 + $0x4] sm:$0xf] %v1106
    // Predicated region
    $region50: #{actor_forward.1} parent=1 // pred_check
      _
    $region51: #{actor_forward.1} parent=1 // pred_check_branch
      %1112 = sbr.rel (0) target = $region53
    $region52: #{actor_forward.1} parent=1 // pred_region
      _
    $region53: #{actor_forward.1} parent=1 // pred_fallthru
      _
    // Predicated region
    $region54: #{actor_forward.1} parent=1 // pred_check
      _
    $region55: #{actor_forward.1} parent=1 // pred_check_branch
      %1114 = sbr.rel (0) target = $region57
    $region56: #{actor_forward.1} parent=1 // pred_region
      _
    $region57: #{actor_forward.1} parent=1 // pred_fallthru
      _
    %1115 = vsyncpa [#allocation3], 1
    %1116 = vsyncpa [#allocation5], 1

</llo_original>
